<compile_context>
chip_gen: v7x
topology: tpu7x:2x2x1
jax: 0.10.0
libtpu: 0.0.40
codegen_flags: <defaults>
</compile_context>

<pallas_src>
import functools

import jax
import jax.numpy as jnp
from jax.experimental import pallas as pl
from jax.experimental.pallas import tpu as pltpu


def _pick_tile_b(b):
    """Largest row tile (<=256) dividing B, so (TILE_B, B) strips stay modest."""
    if b <= 256:
        return b
    for t in (256, 128, 64, 32, 16, 8):
        if b % t == 0:
            return t
    return b


def _wsml_or_kernel(sat_ref, grd_ref, al_ref, ap_ref, out_ref, *,
                    loss_weight, pair_n, theta1, theta2,
                    tile_b, num_blocks, batch_b, mxu_dtype):
    i = pl.program_id(0)
    row0 = pl.multiple_of(i * tile_b, tile_b)

    sat_all = sat_ref[...]                                   # (B, D) resident
    grd_all = grd_ref[...]                                   # (B, D) resident
    sat_blk = sat_ref[pl.ds(row0, tile_b), :]                # (TILE_B, D)
    grd_blk = grd_ref[pl.ds(row0, tile_b), :]                # (TILE_B, D)

    # ---- positive-pair distances (diagonal of dist), no BxB masking needed.
    # pos[i] for the block's rows, natural sublane orientation: (TILE_B, 1).
    pos_col = 2.0 - 2.0 * jnp.sum(
        sat_blk.astype(jnp.float32) * grd_blk.astype(jnp.float32),
        axis=1, keepdims=True)
    # pos[j] for ALL columns, produced lane-oriented (1, B) via a skinny MXU
    # matmul against a ones row -> avoids any (B,1)->(1,B) transpose/relayout.
    prod_all = sat_all.astype(jnp.float32) * grd_all.astype(jnp.float32)
    pos_row = 2.0 - 2.0 * jax.lax.dot_general(
        jnp.ones((1, prod_all.shape[1]), jnp.float32), prod_all,
        dimension_numbers=(((1,), (1,)), ((), ())),
        preferred_element_type=jnp.float32)

    # ---- (TILE_B, B) strip of dist[i, j] = 2 - 2 <sat[i], grd[j]>.
    # Contraction on the last axis of BOTH operands -> MXU fed without
    # materializing grd.T.  Optional bf16 cast for MXU throughput on v6e/v7x;
    # elementwise math below stays f32 (v5e has no bf16 VPU/EUP).
    if mxu_dtype is not None:
        lhs, rhs = sat_blk.astype(mxu_dtype), grd_all.astype(mxu_dtype)
    else:
        lhs, rhs = sat_blk, grd_all
    sim = jax.lax.dot_general(
        lhs, rhs,
        dimension_numbers=(((1,), (1,)), ((), ())),
        preferred_element_type=jnp.float32)
    dist = 2.0 - 2.0 * sim                                   # (TILE_B, B) f32

    # ---- merged numerically-stable softplus pair: 2 exp + 1 log per element.
    w = loss_weight
    a = w * (pos_row - dist)
    b = w * (pos_col - dist)
    sp = (jnp.maximum(a, 0.0) + jnp.maximum(b, 0.0)
          + jnp.log((1.0 + jnp.exp(-jnp.abs(a))) * (1.0 + jnp.exp(-jnp.abs(b)))))
    sp_sum = jnp.sum(sp)

    # ---- orientation regression (tiny B x A; summed once, the BxB broadcast's
    # total is analytically B * sum(dist_OR), split evenly across blocks).
    diff = ap_ref[...].astype(jnp.float32) - al_ref[...].astype(jnp.float32)
    or_sum = jnp.sum(diff * diff)

    pos_sum = jnp.sum(pos_col)
    dist_sum = jnp.sum(dist)

    inv_pair = 1.0 / pair_n
    loss_partial = ((0.5 * theta1 * inv_pair) * sp_sum
                    + (theta2 * batch_b * inv_pair / num_blocks) * or_sum)
    pos_partial = pos_sum * (1.0 / batch_b)      # -> sums to pos_dist.mean()
    nega_partial = (dist_sum - pos_sum) * inv_pair

    # Lane-dense (8,128) partial-result tile: single unmasked store per block.
    lane = jax.lax.broadcasted_iota(jnp.int32, out_ref.shape, 1)
    out_ref[...] = (jnp.where(lane == 0, loss_partial, 0.0)
                    + jnp.where(lane == 1, pos_partial, 0.0)
                    + jnp.where(lane == 2, nega_partial, 0.0))


def weighted_soft_margin_loss_or(sat_global, grd_global, mini_batch,
                                 batch_hard_count, angle_label, angle_pred,
                                 loss_weight=10.0, *, mxu_input_dtype=None):
    """Pallas implementation of WeightedSoftMarginLossOR.forward (batch_hard_count == 0)."""
    if batch_hard_count != 0:
        raise NotImplementedError("batch_hard_count != 0 branch not implemented")

    B, D = sat_global.shape
    A = angle_label.shape[1]
    pair_n = float(mini_batch) * (float(mini_batch) - 1.0)

    tile_b = _pick_tile_b(B)
    num_blocks = B // tile_b

    kernel = functools.partial(
        _wsml_or_kernel,
        loss_weight=float(loss_weight), pair_n=pair_n,
        theta1=10.0, theta2=5.0,
        tile_b=tile_b, num_blocks=num_blocks, batch_b=B,
        mxu_dtype=mxu_input_dtype,
    )

    # VMEM budget: resident sat+grd+angles (loaded once, constant index_map),
    # one (TILE_B, B) f32 strip with ~8x headroom for softplus temporaries,
    # double-buffered (8,128) output tiles, + slack.  Capped at v7x's 64 MiB.
    resident_bytes = (sat_global.size * sat_global.dtype.itemsize
                      + grd_global.size * grd_global.dtype.itemsize
                      + angle_label.size * angle_label.dtype.itemsize
                      + angle_pred.size * angle_pred.dtype.itemsize)
    strip_bytes = 8 * tile_b * B * 4
    out_bytes = 2 * 8 * 128 * 4
    vmem_limit = int(min(max(resident_bytes + strip_bytes + out_bytes + (2 << 20),
                             4 << 20), 64 << 20))

    packed = pl.pallas_call(
        kernel,
        out_shape=jax.ShapeDtypeStruct((num_blocks * 8, 128), jnp.float32),
        grid_spec=pltpu.PrefetchScalarGridSpec(
            num_scalar_prefetch=0,
            grid=(num_blocks,),
            in_specs=[
                pl.BlockSpec((B, D), lambda i: (0, 0)),   # sat: resident full
                pl.BlockSpec((B, D), lambda i: (0, 0)),   # grd: resident full
                pl.BlockSpec((B, A), lambda i: (0, 0)),   # angle_label
                pl.BlockSpec((B, A), lambda i: (0, 0)),   # angle_pred
            ],
            out_specs=pl.BlockSpec((8, 128), lambda i: (i, 0)),
        ),
        compiler_params=pltpu.CompilerParams(
            dimension_semantics=("parallel",),
            vmem_limit_bytes=vmem_limit),
    )(sat_global, grd_global, angle_label, angle_pred)

    # Tiny wrapper-side reduction over per-block partials: (G, 3) -> (3,).
    partials = packed.reshape(num_blocks, 8, 128)[:, 0, :3]
    totals = jnp.sum(partials, axis=0)
    return totals[0], totals[1], totals[2]


def _reference(sat, grd, mini_batch, angle_label, angle_pred, loss_weight=10.0):
    """Pure-JAX reference mirroring the PyTorch forward (batch_hard_count == 0)."""
    dist = 2.0 - 2.0 * sat @ grd.T
    pos = jnp.diagonal(dist)
    pair_n = mini_batch * (mini_batch - 1.0)
    loss_g2s = jnp.log(1.0 + jnp.exp((pos[None, :] - dist) * loss_weight)) / pair_n
    loss_s2g = jnp.log(1.0 + jnp.exp((pos[:, None] - dist) * loss_weight)) / pair_n
    dist_or = jnp.sum((angle_pred - angle_label) ** 2, axis=1)
    loss_or_g = jnp.tile(dist_or[None, :], (dist.shape[0], 1)) / pair_n
    loss_or_s = loss_or_g.T
    loss_g2s = 10.0 * loss_g2s + 5.0 * loss_or_g
    loss_s2g = 10.0 * loss_s2g + 5.0 * loss_or_s
    loss_merge = jnp.sum(loss_g2s + loss_s2g) / 2.0
    pos_avg = jnp.mean(pos)
    nega = jnp.sum((dist - jnp.diag(pos)) / pair_n)
    return loss_merge, pos_avg, nega


if __name__ == "__main__":
    B, D, A = 8, 32, 4
    key = jax.random.PRNGKey(0)
    k1, k2, k3, k4 = jax.random.split(key, 4)

    sat = jax.random.normal(k1, (B, D), dtype=jnp.float32)
    grd = jax.random.normal(k2, (B, D), dtype=jnp.float32)
    # L2-normalize embeddings, as the CVM pipeline does for its global descriptors.
    sat = sat / jnp.linalg.norm(sat, axis=1, keepdims=True)
    grd = grd / jnp.linalg.norm(grd, axis=1, keepdims=True)

    angle_label = jax.random.normal(k3, (B, A), dtype=jnp.float32)
    angle_pred = jax.random.normal(k4, (B, A), dtype=jnp.float32)

    mini_batch = B
    batch_hard_count = 0

    loss_merge, pos_avg, nega_sum = weighted_soft_margin_loss_or(
        sat, grd, mini_batch, batch_hard_count, angle_label, angle_pred)
    jax.block_until_ready((loss_merge, pos_avg, nega_sum))

    ref = _reference(sat, grd, float(mini_batch), angle_label, angle_pred)
    assert jnp.allclose(loss_merge, ref[0], rtol=1e-4, atol=1e-4)
    assert jnp.allclose(pos_avg, ref[1], rtol=1e-4, atol=1e-4)
    assert jnp.allclose(nega_sum, ref[2], rtol=1e-4, atol=1e-4)

    print("KERNEL_OK")
</pallas_src>

<mosaic_0001>
module attributes {stable_mosaic.version = 11 : i64} {
  func.func @_wsml_or_kernel(%arg0: i32, %arg1: memref<8x32xf32, #tpu.memory_space<vmem>>, %arg2: memref<8x32xf32, #tpu.memory_space<vmem>>, %arg3: memref<8x4xf32, #tpu.memory_space<vmem>>, %arg4: memref<8x4xf32, #tpu.memory_space<vmem>>, %arg5: memref<8x128xf32, #tpu.memory_space<vmem>>) attributes {dimension_semantics = [#tpu.dimension_semantics<parallel>], iteration_bounds = array<i64: 1>, scalar_prefetch = 0 : i64, scratch_operands = 0 : i64, tpu.core_type = #tpu.core_type<tc>, window_params = [{pipeline_mode = #tpu.pipeline_mode<synchronous>, transform_indices = @transform_0, window_bounds = array<i64: 8, 32>}, {pipeline_mode = #tpu.pipeline_mode<synchronous>, transform_indices = @transform_1, window_bounds = array<i64: 8, 32>}, {pipeline_mode = #tpu.pipeline_mode<synchronous>, transform_indices = @transform_2, window_bounds = array<i64: 8, 4>}, {pipeline_mode = #tpu.pipeline_mode<synchronous>, transform_indices = @transform_3, window_bounds = array<i64: 8, 4>}, {transform_indices = @transform_4, window_bounds = array<i64: 8, 128>}]} {
    %c8_i32 = arith.constant 8 : i32
    %0 = arith.muli %arg0, %c8_i32 : i32
    %1 = tpu.assume_multiple %0, 8 : i32
    %c0 = arith.constant 0 : index
    %c0_0 = arith.constant 0 : index
    %2 = vector.load %arg1[%c0, %c0_0] : memref<8x32xf32, #tpu.memory_space<vmem>>, vector<8x32xf32>
    %c0_1 = arith.constant 0 : index
    %c0_2 = arith.constant 0 : index
    %3 = vector.load %arg2[%c0_1, %c0_2] : memref<8x32xf32, #tpu.memory_space<vmem>>, vector<8x32xf32>
    %4 = arith.index_cast %1 : i32 to index
    %c0_3 = arith.constant 0 : index
    %5 = vector.load %arg1[%4, %c0_3] : memref<8x32xf32, #tpu.memory_space<vmem>>, vector<8x32xf32>
    %6 = arith.index_cast %1 : i32 to index
    %c0_4 = arith.constant 0 : index
    %7 = vector.load %arg2[%6, %c0_4] : memref<8x32xf32, #tpu.memory_space<vmem>>, vector<8x32xf32>
    %8 = arith.mulf %5, %7 : vector<8x32xf32>
    %cst = arith.constant dense<0.000000e+00> : vector<8xf32>
    %9 = vector.multi_reduction <add>, %8, %cst [1] : vector<8x32xf32> to vector<8xf32>
    %10 = vector.shape_cast %9 : vector<8xf32> to vector<8x1xf32>
    %cst_5 = arith.constant 2.000000e+00 : f32
    %11 = vector.broadcast %cst_5 : f32 to vector<8x1xf32>
    %12 = arith.mulf %11, %10 : vector<8x1xf32>
    %cst_6 = arith.constant 2.000000e+00 : f32
    %13 = vector.broadcast %cst_6 : f32 to vector<8x1xf32>
    %14 = arith.subf %13, %12 : vector<8x1xf32>
    %15 = arith.mulf %2, %3 : vector<8x32xf32>
    %cst_7 = arith.constant 1.000000e+00 : f32
    %16 = vector.broadcast %cst_7 : f32 to vector<1x32xf32>
    %cst_8 = arith.constant dense<0.000000e+00> : vector<1x8xf32>
    %17 = tpu.matmul %16, %15, %cst_8 {dimension_numbers = #tpu.dot_dimension_numbers<[1], [1], [0], [0], [0, 0, 1, 0], [], []>} : vector<1x32xf32>, vector<8x32xf32>, vector<1x8xf32> -> vector<1x8xf32>
    %cst_9 = arith.constant 2.000000e+00 : f32
    %18 = vector.broadcast %cst_9 : f32 to vector<1x8xf32>
    %19 = arith.mulf %18, %17 : vector<1x8xf32>
    %cst_10 = arith.constant 2.000000e+00 : f32
    %20 = vector.broadcast %cst_10 : f32 to vector<1x8xf32>
    %21 = arith.subf %20, %19 : vector<1x8xf32>
    %cst_11 = arith.constant dense<0.000000e+00> : vector<8x8xf32>
    %22 = tpu.matmul %5, %3, %cst_11 {dimension_numbers = #tpu.dot_dimension_numbers<[1], [1], [0], [0], [0, 0, 1, 0], [], []>} : vector<8x32xf32>, vector<8x32xf32>, vector<8x8xf32> -> vector<8x8xf32>
    %cst_12 = arith.constant 2.000000e+00 : f32
    %23 = vector.broadcast %cst_12 : f32 to vector<8x8xf32>
    %24 = arith.mulf %23, %22 : vector<8x8xf32>
    %cst_13 = arith.constant 2.000000e+00 : f32
    %25 = vector.broadcast %cst_13 : f32 to vector<8x8xf32>
    %26 = arith.subf %25, %24 : vector<8x8xf32>
    %27 = vector.broadcast %21 : vector<1x8xf32> to vector<8x8xf32>
    %28 = arith.subf %27, %26 : vector<8x8xf32>
    %cst_14 = arith.constant 1.000000e+01 : f32
    %29 = vector.broadcast %cst_14 : f32 to vector<8x8xf32>
    %30 = arith.mulf %29, %28 : vector<8x8xf32>
    %31 = vector.broadcast %14 : vector<8x1xf32> to vector<8x8xf32>
    %32 = arith.subf %31, %26 : vector<8x8xf32>
    %cst_15 = arith.constant 1.000000e+01 : f32
    %33 = vector.broadcast %cst_15 : f32 to vector<8x8xf32>
    %34 = arith.mulf %33, %32 : vector<8x8xf32>
    %cst_16 = arith.constant 0.000000e+00 : f32
    %35 = vector.broadcast %cst_16 : f32 to vector<8x8xf32>
    %36 = arith.maximumf %30, %35 : vector<8x8xf32>
    %cst_17 = arith.constant 0.000000e+00 : f32
    %37 = vector.broadcast %cst_17 : f32 to vector<8x8xf32>
    %38 = arith.maximumf %34, %37 : vector<8x8xf32>
    %39 = arith.addf %36, %38 : vector<8x8xf32>
    %40 = math.absf %30 : vector<8x8xf32>
    %cst_18 = arith.constant 0.000000e+00 : f32
    %41 = vector.broadcast %cst_18 : f32 to vector<8x8xf32>
    %42 = arith.subf %41, %40 : vector<8x8xf32>
    %43 = math.exp %42 : vector<8x8xf32>
    %cst_19 = arith.constant 1.000000e+00 : f32
    %44 = vector.broadcast %cst_19 : f32 to vector<8x8xf32>
    %45 = arith.addf %44, %43 : vector<8x8xf32>
    %46 = math.absf %34 : vector<8x8xf32>
    %cst_20 = arith.constant 0.000000e+00 : f32
    %47 = vector.broadcast %cst_20 : f32 to vector<8x8xf32>
    %48 = arith.subf %47, %46 : vector<8x8xf32>
    %49 = math.exp %48 : vector<8x8xf32>
    %cst_21 = arith.constant 1.000000e+00 : f32
    %50 = vector.broadcast %cst_21 : f32 to vector<8x8xf32>
    %51 = arith.addf %50, %49 : vector<8x8xf32>
    %52 = arith.mulf %45, %51 : vector<8x8xf32>
    %53 = math.log %52 : vector<8x8xf32>
    %54 = arith.addf %39, %53 : vector<8x8xf32>
    %55 = vector.shape_cast %54 : vector<8x8xf32> to vector<1x8x8xf32>
    %cst_22 = arith.constant dense<0.000000e+00> : vector<1xf32>
    %56 = vector.multi_reduction <add>, %55, %cst_22 [1, 2] : vector<1x8x8xf32> to vector<1xf32>
    %57 = vector.shape_cast %56 : vector<1xf32> to vector<1x1x1xf32>
    %58 = vector.extract %57[0, 0, 0] : f32 from vector<1x1x1xf32>
    %c0_23 = arith.constant 0 : index
    %c0_24 = arith.constant 0 : index
    %59 = vector.load %arg4[%c0_23, %c0_24] : memref<8x4xf32, #tpu.memory_space<vmem>>, vector<8x4xf32>
    %c0_25 = arith.constant 0 : index
    %c0_26 = arith.constant 0 : index
    %60 = vector.load %arg3[%c0_25, %c0_26] : memref<8x4xf32, #tpu.memory_space<vmem>>, vector<8x4xf32>
    %61 = arith.subf %59, %60 : vector<8x4xf32>
    %62 = arith.mulf %61, %61 : vector<8x4xf32>
    %63 = vector.shape_cast %62 : vector<8x4xf32> to vector<1x8x4xf32>
    %cst_27 = arith.constant dense<0.000000e+00> : vector<1xf32>
    %64 = vector.multi_reduction <add>, %63, %cst_27 [1, 2] : vector<1x8x4xf32> to vector<1xf32>
    %65 = vector.shape_cast %64 : vector<1xf32> to vector<1x1x1xf32>
    %66 = vector.extract %65[0, 0, 0] : f32 from vector<1x1x1xf32>
    %67 = vector.shape_cast %14 : vector<8x1xf32> to vector<1x8x1xf32>
    %cst_28 = arith.constant dense<0.000000e+00> : vector<1xf32>
    %68 = vector.multi_reduction <add>, %67, %cst_28 [1, 2] : vector<1x8x1xf32> to vector<1xf32>
    %69 = vector.shape_cast %68 : vector<1xf32> to vector<1x1x1xf32>
    %70 = vector.extract %69[0, 0, 0] : f32 from vector<1x1x1xf32>
    %71 = vector.shape_cast %26 : vector<8x8xf32> to vector<1x8x8xf32>
    %cst_29 = arith.constant dense<0.000000e+00> : vector<1xf32>
    %72 = vector.multi_reduction <add>, %71, %cst_29 [1, 2] : vector<1x8x8xf32> to vector<1xf32>
    %73 = vector.shape_cast %72 : vector<1xf32> to vector<1x1x1xf32>
    %74 = vector.extract %73[0, 0, 0] : f32 from vector<1x1x1xf32>
    %cst_30 = arith.constant 0.0892857164 : f32
    %75 = arith.mulf %cst_30, %58 : f32
    %cst_31 = arith.constant 0.714285731 : f32
    %76 = arith.mulf %cst_31, %66 : f32
    %77 = arith.addf %75, %76 : f32
    %cst_32 = arith.constant 1.250000e-01 : f32
    %78 = arith.mulf %70, %cst_32 : f32
    %79 = arith.subf %74, %70 : f32
    %cst_33 = arith.constant 0.0178571437 : f32
    %80 = arith.mulf %79, %cst_33 : f32
    %81 = tpu.iota {dimensions = array<i32: 1>} : vector<8x128xi32>
    %c0_i32 = arith.constant 0 : i32
    %82 = vector.broadcast %c0_i32 : i32 to vector<8x128xi32>
    %83 = arith.cmpi eq, %81, %82 : vector<8x128xi32>
    %cst_34 = arith.constant 0.000000e+00 : f32
    %84 = vector.broadcast %77 : f32 to vector<8x128xf32>
    %85 = vector.broadcast %cst_34 : f32 to vector<8x128xf32>
    %86 = arith.select %83, %84, %85 : vector<8x128xi1>, vector<8x128xf32>
    %c1_i32 = arith.constant 1 : i32
    %87 = vector.broadcast %c1_i32 : i32 to vector<8x128xi32>
    %88 = arith.cmpi eq, %81, %87 : vector<8x128xi32>
    %cst_35 = arith.constant 0.000000e+00 : f32
    %89 = vector.broadcast %78 : f32 to vector<8x128xf32>
    %90 = vector.broadcast %cst_35 : f32 to vector<8x128xf32>
    %91 = arith.select %88, %89, %90 : vector<8x128xi1>, vector<8x128xf32>
    %92 = arith.addf %86, %91 : vector<8x128xf32>
    %c2_i32 = arith.constant 2 : i32
    %93 = vector.broadcast %c2_i32 : i32 to vector<8x128xi32>
    %94 = arith.cmpi eq, %81, %93 : vector<8x128xi32>
    %cst_36 = arith.constant 0.000000e+00 : f32
    %95 = vector.broadcast %80 : f32 to vector<8x128xf32>
    %96 = vector.broadcast %cst_36 : f32 to vector<8x128xf32>
    %97 = arith.select %94, %95, %96 : vector<8x128xi1>, vector<8x128xf32>
    %98 = arith.addf %92, %97 : vector<8x128xf32>
    %c0_37 = arith.constant 0 : index
    %c0_38 = arith.constant 0 : index
    %99 = vector.load %arg5[%c0_37, %c0_38] : memref<8x128xf32, #tpu.memory_space<vmem>>, vector<8x128xf32>
    tpu.vector_store %arg5[%c0_37, %c0_38], %98 {strides = array<i32>} : memref<8x128xf32, #tpu.memory_space<vmem>>, vector<8x128xf32>,
    return
  }
  func.func @transform_0(%arg0: i32) -> (i32, i32) {
    %c0_i32 = arith.constant 0 : i32
    %c0_i32_0 = arith.constant 0 : i32
    %c0_i32_1 = arith.constant 0 : i32
    return %c0_i32, %c0_i32_0 : i32, i32
  }
  func.func @transform_1(%arg0: i32) -> (i32, i32) {
    %c0_i32 = arith.constant 0 : i32
    %c0_i32_0 = arith.constant 0 : i32
    %c0_i32_1 = arith.constant 0 : i32
    return %c0_i32, %c0_i32_0 : i32, i32
  }
  func.func @transform_2(%arg0: i32) -> (i32, i32) {
    %c0_i32 = arith.constant 0 : i32
    %c0_i32_0 = arith.constant 0 : i32
    %c0_i32_1 = arith.constant 0 : i32
    return %c0_i32, %c0_i32_0 : i32, i32
  }
  func.func @transform_3(%arg0: i32) -> (i32, i32) {
    %c0_i32 = arith.constant 0 : i32
    %c0_i32_0 = arith.constant 0 : i32
    %c0_i32_1 = arith.constant 0 : i32
    return %c0_i32, %c0_i32_0 : i32, i32
  }
  func.func @transform_4(%arg0: i32) -> (i32, i32) {
    %c0_i32 = arith.constant 0 : i32
    %c0_i32_0 = arith.constant 0 : i32
    return %arg0, %c0_i32 : i32, i32
  }
}

</mosaic_0001>

<llo_original>
// kernel: tpu_custom_call.1
$region0: #{tpu_custom_call.1}
  #allocation0 [shape = 'u32[]', space=smem, size = 0x4, offset = 0x4, fixed_abs, tag = 'smem constant byte address 0x4 - core index']
  #allocation1 [shape = 'u32[144,128]{1,0:T(1,128)}', space=vmem, size = 0x12000, scoped, tag = 'internal scratch']
  %s0 = inlined_call_operand.vmem [shape: f32[8,32], index: 0, kind: input, shape index: {}]
  %s1 = inlined_call_operand.vmem [shape: f32[8,32], index: 1, kind: input, shape index: {}]
  %s2 = inlined_call_operand.vmem [shape: f32[8,4], index: 2, kind: input, shape index: {}]
  %s3 = inlined_call_operand.vmem [shape: f32[8,4], index: 3, kind: input, shape index: {}]
  %s4 = inlined_call_operand.hbm [shape: f32[8,128], index: 4, kind: output, shape index: {}]
  %s5 = sld [smem:[#allocation0]]
  $region26: #{tpu_custom_call.1} parent=0
    _
  %s7 = ssub.s32 1, %s5
  %s8 = scalar_select 0, %s7, %s5
  $region1: #{tpu_custom_call.1} parent=0
    #allocation2 [shape = 'u8[4096]{0}', space=vmem, size = 0x1000, scoped, tag = 'output window, operand 0, single buffered']
    #allocation3 [shape = 's32[1]{0}', space=sflag, size = 0x4, scoped, tag = 'scoped memory for tpu_custom_call.1']
    %9 = vsyncpa [#allocation3], 0
    // Predicated region
    $region2: #{tpu_custom_call.1} parent=1 // pred_check
      _
    $region3: #{tpu_custom_call.1} parent=1 // pred_check_branch
      %11 = sbr.rel (0) target = $region5
    $region4: #{tpu_custom_call.1} parent=1 // pred_region
      _
    $region5: #{tpu_custom_call.1} parent=1 // pred_fallthru
      _
    // Predicated region
    $region6: #{tpu_custom_call.1} parent=1 // pred_check
      _
    $region7: #{tpu_custom_call.1} parent=1 // pred_check_branch
      %13 = sbr.rel (0) target = $region9
    $region8: #{tpu_custom_call.1} parent=1 // pred_region
      _
    $region9: #{tpu_custom_call.1} parent=1 // pred_fallthru
      _
    // Predicated region
    $region10: #{tpu_custom_call.1} parent=1 // pred_check
      _
    $region11: #{tpu_custom_call.1} parent=1 // pred_check_branch
      %15 = sbr.rel (0) target = $region13
    $region12: #{tpu_custom_call.1} parent=1 // pred_region
      _
    $region13: #{tpu_custom_call.1} parent=1 // pred_fallthru
      _
    // Predicated region
    $region14: #{tpu_custom_call.1} parent=1 // pred_check
      _
    $region15: #{tpu_custom_call.1} parent=1 // pred_check_branch
      %17 = sbr.rel (0) target = $region17
    $region16: #{tpu_custom_call.1} parent=1 // pred_region
      _
    $region17: #{tpu_custom_call.1} parent=1 // pred_fallthru
      _
    %s18 = smul.u32 0, 8
    %v19 = vld [vmem:[%s0] sm:$0xff]
    %v20 = vld [vmem:[%s1] sm:$0xff]
    %s21 = scalar_lea.vmem %s0, %s18
    %v22 = vld [vmem:[%s21] sm:$0xff]
    %s23 = scalar_lea.vmem %s1, %s18
    %v24 = vld [vmem:[%s23] sm:$0xff]
    %v25 = vmul.f32 %v22, %v24
    %vm26 = vcmask 261120
    %v27 = vsel %vm26, %v25, 0.0
    %28 = vadd.xlane.f32.xlu0 %v27
    %v29 = vpop.xlane.xlu0 %28
    %v30 = vmul.f32 %v29, 2.0
    %v31 = vsub.f32 2.0, %v30
    %v32 = vmul.f32 %v19, %v20
    %v34 = vsel %vm26, 1.0, 0
    %v37 = vsel %vm26, %v32, 0
    %39 = vmatprep.subr.mxu0 0.0
    %40 = vmatpush1.xpose.msra.mxu0 %v37
    %41 = vmatprep.subr.mxu0 0.0
    %42 = vmatpush1.xpose.msra.mxu0 0.0
    %43 = vmatprep.subr.mxu0 0.0
    %44 = vmatpush1.xpose.msra.mxu0 0.0
    %45 = vmatprep.subr.mxu0 0.0
    %46 = vmatpush1.xpose.msra.mxu0 0.0
    %47 = vmatprep.subr.mxu0 0.0
    %48 = vmatpush1.xpose.msra.mxu0 0.0
    %49 = vmatprep.subr.mxu0 0.0
    %50 = vmatpush1.xpose.msra.mxu0 0.0
    %51 = vmatprep.subr.mxu0 0.0
    %52 = vmatpush1.xpose.msra.mxu0 0.0
    %53 = vmatprep.subr.mxu0 0.0
    %54 = vmatpush1.xpose.msra.mxu0 0.0
    %55 = vmatprep.subr.mxu0 0.0
    %56 = vmatpush1.xpose.msra.mxu0 0.0
    %57 = vmatprep.subr.mxu0 0.0
    %58 = vmatpush1.xpose.msra.mxu0 0.0
    %59 = vmatprep.subr.mxu0 0.0
    %60 = vmatpush1.xpose.msra.mxu0 0.0
    %61 = vmatprep.subr.mxu0 0.0
    %62 = vmatpush1.xpose.msra.mxu0 0.0
    %63 = vmatprep.subr.mxu0 0.0
    %64 = vmatpush1.xpose.msra.mxu0 0.0
    %65 = vmatprep.subr.mxu0 0.0
    %66 = vmatpush1.xpose.msra.mxu0 0.0
    %67 = vmatprep.subr.mxu0 0.0
    %68 = vmatpush1.xpose.msra.mxu0 0.0
    %69 = vmatprep.subr.mxu0 0.0
    %70 = vmatpush1.xpose.msra.mxu0 0.0
    %71 = vmatprep.subr.mxu0 0.0
    %72 = vmatpush1.xpose.msra.mxu0 0.0
    %73 = vmatprep.subr.mxu0 0.0
    %74 = vmatpush1.xpose.msra.mxu0 0.0
    %75 = vmatprep.subr.mxu0 0.0
    %76 = vmatpush1.xpose.msra.mxu0 0.0
    %77 = vmatprep.subr.mxu0 0.0
    %78 = vmatpush1.xpose.msra.mxu0 0.0
    %79 = vmatprep.subr.mxu0 0.0
    %80 = vmatpush1.xpose.msra.mxu0 0.0
    %81 = vmatprep.subr.mxu0 0.0
    %82 = vmatpush1.xpose.msra.mxu0 0.0
    %83 = vmatprep.subr.mxu0 0.0
    %84 = vmatpush1.xpose.msra.mxu0 0.0
    %85 = vmatprep.subr.mxu0 0.0
    %86 = vmatpush1.xpose.msra.mxu0 0.0
    %87 = vmatprep.subr.mxu0 0.0
    %88 = vmatpush1.xpose.msra.mxu0 0.0
    %89 = vmatprep.subr.mxu0 0.0
    %90 = vmatpush1.xpose.msra.mxu0 0.0
    %91 = vmatprep.subr.mxu0 0.0
    %92 = vmatpush1.xpose.msra.mxu0 0.0
    %93 = vmatprep.subr.mxu0 0.0
    %94 = vmatpush1.xpose.msra.mxu0 0.0
    %95 = vmatprep.subr.mxu0 0.0
    %96 = vmatpush1.xpose.msra.mxu0 0.0
    %97 = vmatprep.subr.mxu0 0.0
    %98 = vmatpush1.xpose.msra.mxu0 0.0
    %99 = vmatprep.subr.mxu0 0.0
    %100 = vmatpush1.xpose.msra.mxu0 0.0
    %101 = vmatprep.subr.mxu0 0.0
    %102 = vmatpush1.xpose.msra.mxu0 0.0
    %103 = vmatprep.mubr.f32.mxu0 0.0
    %104 = vmatmul.mubr.f32.gmra.mrb[0].mxu0 %v34
    %v105 = vpop.f32.mrb[0].mxu0
    %v106 = vadd.f32 0.0, %v105
    %v107 = vpop.f32.mrb[0].mxu0
    %108 = vdwg.mxu0
    %v109 = vmul.f32 %v106, 2.0
    %v110 = vsub.f32 2.0, %v109
    %v112 = vsel %vm26, %v22, 0
    %v115 = vsel %vm26, %v20, 0
    %117 = vmatprep.subr.mxu0 0.0
    %118 = vmatpush1.xpose.msra.mxu0 %v115
    %119 = vmatprep.subr.mxu0 0.0
    %120 = vmatpush1.xpose.msra.mxu0 0.0
    %121 = vmatprep.subr.mxu0 0.0
    %122 = vmatpush1.xpose.msra.mxu0 0.0
    %123 = vmatprep.subr.mxu0 0.0
    %124 = vmatpush1.xpose.msra.mxu0 0.0
    %125 = vmatprep.subr.mxu0 0.0
    %126 = vmatpush1.xpose.msra.mxu0 0.0
    %127 = vmatprep.subr.mxu0 0.0
    %128 = vmatpush1.xpose.msra.mxu0 0.0
    %129 = vmatprep.subr.mxu0 0.0
    %130 = vmatpush1.xpose.msra.mxu0 0.0
    %131 = vmatprep.subr.mxu0 0.0
    %132 = vmatpush1.xpose.msra.mxu0 0.0
    %133 = vmatprep.subr.mxu0 0.0
    %134 = vmatpush1.xpose.msra.mxu0 0.0
    %135 = vmatprep.subr.mxu0 0.0
    %136 = vmatpush1.xpose.msra.mxu0 0.0
    %137 = vmatprep.subr.mxu0 0.0
    %138 = vmatpush1.xpose.msra.mxu0 0.0
    %139 = vmatprep.subr.mxu0 0.0
    %140 = vmatpush1.xpose.msra.mxu0 0.0
    %141 = vmatprep.subr.mxu0 0.0
    %142 = vmatpush1.xpose.msra.mxu0 0.0
    %143 = vmatprep.subr.mxu0 0.0
    %144 = vmatpush1.xpose.msra.mxu0 0.0
    %145 = vmatprep.subr.mxu0 0.0
    %146 = vmatpush1.xpose.msra.mxu0 0.0
    %147 = vmatprep.subr.mxu0 0.0
    %148 = vmatpush1.xpose.msra.mxu0 0.0
    %149 = vmatprep.subr.mxu0 0.0
    %150 = vmatpush1.xpose.msra.mxu0 0.0
    %151 = vmatprep.subr.mxu0 0.0
    %152 = vmatpush1.xpose.msra.mxu0 0.0
    %153 = vmatprep.subr.mxu0 0.0
    %154 = vmatpush1.xpose.msra.mxu0 0.0
    %155 = vmatprep.subr.mxu0 0.0
    %156 = vmatpush1.xpose.msra.mxu0 0.0
    %157 = vmatprep.subr.mxu0 0.0
    %158 = vmatpush1.xpose.msra.mxu0 0.0
    %159 = vmatprep.subr.mxu0 0.0
    %160 = vmatpush1.xpose.msra.mxu0 0.0
    %161 = vmatprep.subr.mxu0 0.0
    %162 = vmatpush1.xpose.msra.mxu0 0.0
    %163 = vmatprep.subr.mxu0 0.0
    %164 = vmatpush1.xpose.msra.mxu0 0.0
    %165 = vmatprep.subr.mxu0 0.0
    %166 = vmatpush1.xpose.msra.mxu0 0.0
    %167 = vmatprep.subr.mxu0 0.0
    %168 = vmatpush1.xpose.msra.mxu0 0.0
    %169 = vmatprep.subr.mxu0 0.0
    %170 = vmatpush1.xpose.msra.mxu0 0.0
    %171 = vmatprep.subr.mxu0 0.0
    %172 = vmatpush1.xpose.msra.mxu0 0.0
    %173 = vmatprep.subr.mxu0 0.0
    %174 = vmatpush1.xpose.msra.mxu0 0.0
    %175 = vmatprep.subr.mxu0 0.0
    %176 = vmatpush1.xpose.msra.mxu0 0.0
    %177 = vmatprep.subr.mxu0 0.0
    %178 = vmatpush1.xpose.msra.mxu0 0.0
    %179 = vmatprep.subr.mxu0 0.0
    %180 = vmatpush1.xpose.msra.mxu0 0.0
    %181 = vmatprep.mubr.f32.mxu0 0.0
    %182 = vmatmul.mubr.f32.gmra.mrb[0].mxu0 %v112
    %v183 = vpop.f32.mrb[0].mxu0
    %v184 = vadd.f32 0.0, %v183
    %v185 = vpop.f32.mrb[0].mxu0
    %186 = vdwg.mxu0
    %v187 = vmul.f32 %v184, 2.0
    %v188 = vsub.f32 2.0, %v187
    %v189 = vlaneseq
    %v190 = vshrl.u32 %v189, 7
    %v191 = vsub.s32 0, %v190
    %v192 = vrot.slane %v110, %v191
    %v193 = vsub.f32 %v192, %v188
    %v194 = vmul.f32 %v193, 10.0
    %v195 = vsub.f32 %v31, %v188
    %v196 = vmul.f32 %v195, 10.0
    %v197 = vmax.f32 %v194, 0.0
    %v198 = vmax.f32 %v196, 0.0
    %v199 = vadd.f32 %v197, %v198
    %v200 = vand.u32 2147483647, %v194
    %v201 = vsub.f32 0.0, %v200
    %v202 = vmul.f32 %v201, 1.442695
    %v203 = vpow.pop %v202
    %v204 = vadd.f32 %v203, 1.0
    %v205 = vand.u32 2147483647, %v196
    %v206 = vsub.f32 0.0, %v205
    %v207 = vmul.f32 %v206, 1.442695
    %v208 = vpow.pop %v207
    %v209 = vadd.f32 %v208, 1.0
    %v210 = vmul.f32 %v204, %v209
    %v211 = vlog2.pop %v210
    %v212 = vmul.f32 %v211, 0.6931472
    %v213 = vadd.f32 %v199, %v212
    %vm214 = vcmask 64512
    %v215 = vsel %vm214, %v213, 0.0
    %216 = vadd.xlane.f32.xlu0 %v215
    %v217 = vpop.xlane.xlu0 %216
    %v218 = vrot.slane %v217, 4
    %v219 = vadd.f32 %v217, %v218
    %v220 = vrot.slane %v219, 2
    %v221 = vadd.f32 %v219, %v220
    %v222 = vrot.slane %v221, 1
    %v223 = vadd.f32 %v221, %v222
    %s224 = vtos %v223
    %v225 = vld [vmem:[%s3] sm:$0xff]
    %v226 = vld [vmem:[%s2] sm:$0xff]
    %v227 = vsub.f32 %v225, %v226
    %v228 = vmul.f32 %v227, %v227
    %vm229 = vcmask 31744
    %v230 = vsel %vm229, %v228, 0.0
    %231 = vadd.xlane.f32.xlu0 %v230
    %v232 = vpop.xlane.xlu0 %231
    %v233 = vrot.slane %v232, 4
    %v234 = vadd.f32 %v232, %v233
    %v235 = vrot.slane %v234, 2
    %v236 = vadd.f32 %v234, %v235
    %v237 = vrot.slane %v236, 1
    %v238 = vadd.f32 %v236, %v237
    %s239 = vtos %v238
    %vm240 = vcmask 7168
    %v241 = vsel %vm240, %v31, 0.0
    %242 = vadd.xlane.f32.xlu0 %v241
    %v243 = vpop.xlane.xlu0 %242
    %v244 = vrot.slane %v243, 4
    %v245 = vadd.f32 %v243, %v244
    %v246 = vrot.slane %v245, 2
    %v247 = vadd.f32 %v245, %v246
    %v248 = vrot.slane %v247, 1
    %v249 = vadd.f32 %v247, %v248
    %s250 = vtos %v249
    %v251 = vsel %vm214, %v188, 0.0
    %252 = vadd.xlane.f32.xlu0 %v251
    %v253 = vpop.xlane.xlu0 %252
    %v254 = vrot.slane %v253, 4
    %v255 = vadd.f32 %v253, %v254
    %v256 = vrot.slane %v255, 2
    %v257 = vadd.f32 %v255, %v256
    %v258 = vrot.slane %v257, 1
    %v259 = vadd.f32 %v257, %v258
    %s260 = vtos %v259
    %s261 = smul.f32 %s224, 0.08928572
    %s262 = smul.f32 %s239, 0.71428573
    %s263 = sadd.f32 %s261, %s262
    %s264 = smul.f32 %s250, 0.125
    %s265 = ssub.f32 %s260, %s250
    %s266 = smul.f32 %s265, 0.017857144
    %v267 = vlaneseq
    %v268 = vand.u32 %v267, 127
    %vm269 = vcmp.eq.s32.totalorder %v268, 0
    %v270 = vstv %s263
    %v271 = vsel %vm269, %v270, 0.0
    %vm272 = vcmp.eq.s32.totalorder %v268, 1
    %v273 = vstv %s264
    %v274 = vsel %vm272, %v273, 0.0
    %v275 = vadd.f32 %v271, %v274
    %vm276 = vcmp.eq.s32.totalorder %v268, 2
    %v277 = vstv %s266
    %v278 = vsel %vm276, %v277, 0.0
    %v279 = vadd.f32 %v275, %v278
    %280 = vst [vmem:[#allocation2] sm:$0xff] %v279
    // Predicated region
    $region18: #{tpu_custom_call.1} parent=1 // pred_check
      _
    $region19: #{tpu_custom_call.1} parent=1 // pred_check_branch
      %282 = sbr.rel (0) target = $region21
    $region20: #{tpu_custom_call.1} parent=1 // pred_region
      %s284 = ssub.s32 128, 128
      %285 = vsyncadd [#allocation3], %s284
      %s287 = sshll.u32 [#allocation2], 4
      %s288 = int_to_ptr.vmem [resolvable:$true] %s287
      %290 = dma.vmem_to_hbm [thread:$0]  %s288, 128, %s4, [#allocation3]
    $region21: #{tpu_custom_call.1} parent=1 // pred_fallthru
      _
    // Predicated region
    $region22: #{tpu_custom_call.1} parent=1 // pred_check
      _
    $region23: #{tpu_custom_call.1} parent=1 // pred_check_branch
      %292 = sbr.rel (0) target = $region25
    $region24: #{tpu_custom_call.1} parent=1 // pred_region
      %293 = dma.done [#allocation3], 128
    $region25: #{tpu_custom_call.1} parent=1 // pred_fallthru
      _
    %294 = vsyncpa [#allocation3], 1

</llo_original>
